<compile_context>
chip_gen: v7x
topology: tpu7x:2x2x1
jax: 0.10.0
libtpu: 0.0.40
codegen_flags: <defaults>
</compile_context>

<pallas_src>
import jax
import jax.numpy as jnp
from jax.experimental import pallas as pl
from jax.experimental.pallas import tpu as pltpu

IN_FEATURES = 10
OUT_FEATURES = 10


# ---------------------------------------------------------------------------
# Kernels
# ---------------------------------------------------------------------------
def linear_kernel(x_ref, wt_ref, b_ref, o_ref):
    """Batch-major tile: o = x @ W^T + b."""
    # x_ref:  (TB, IN)   batch tile (pipelined)
    # wt_ref: (IN, OUT)  pre-transposed weight, VMEM-resident across the grid
    # b_ref:  (1, OUT)   f32 bias, VMEM-resident across the grid
    # o_ref:  (TB, OUT)
    y = jnp.dot(x_ref[...], wt_ref[...], preferred_element_type=jnp.float32)
    o_ref[...] = (y + b_ref[...]).astype(o_ref.dtype)


def linear_fm_kernel(xt_ref, w_ref, b_ref, ot_ref):
    """Feature-major tile: o^T = W @ x^T + b (batch on the 128-lane axis)."""
    # xt_ref: (IN, TB)   activation tile, lane-dense along batch
    # w_ref:  (OUT, IN)  weight as-is (PyTorch layout), VMEM-resident
    # b_ref:  (OUT, 1)   f32 bias
    # ot_ref: (OUT, TB)
    y = jnp.dot(w_ref[...], xt_ref[...], preferred_element_type=jnp.float32)
    ot_ref[...] = (y + b_ref[...]).astype(ot_ref.dtype)


# ---------------------------------------------------------------------------
# Per-generation budgets
# ---------------------------------------------------------------------------
def _chip_budget():
    kind = ""
    try:
        kind = jax.devices()[0].device_kind.lower()
    except Exception:
        pass
    if "v7" in kind:
        # 64 MiB physical VMEM (32 MiB default scoped) and 2 TensorCores.
        return dict(tb_cap=12288, vmem_cap=48 << 20, two_cores=True)
    if "v6" in kind:
        return dict(tb_cap=16384, vmem_cap=100 << 20, two_cores=False)
    if "v5" in kind:
        # 128 MiB physical but 16 MiB default scoped limit -> we raise it.
        return dict(tb_cap=8192, vmem_cap=100 << 20, two_cores=False)
    # Unknown chip: conservative.
    return dict(tb_cap=8192, vmem_cap=48 << 20, two_cores=False)


def _maybe_buffered_spec(block_shape, index_map, buffers):
    """BlockSpec with optional deeper pipelining; falls back cleanly if the
    pipeline_mode kwarg is unavailable in this JAX version."""
    if buffers and buffers > 2:
        try:
            return pl.BlockSpec(block_shape, index_map,
                                pipeline_mode=pl.Buffered(buffers))
        except TypeError:
            pass
    return pl.BlockSpec(block_shape, index_map)


# ---------------------------------------------------------------------------
# Batch-major forward:  y = x @ W^T + b   (x is (B, 10), PyTorch layout weight)
# ---------------------------------------------------------------------------
def dummy_network_forward(x, weight, bias, *, out_dtype=None,
                          batch_tile=16384, buffers=2):
    """Same math as nn.Linear(10, 10).forward(x).

    x:       (B, 10)  — computed in x's native dtype (supply bf16 upstream if
                        you want the bandwidth win; no wrapper-side cast here).
    weight:  (10, 10) — PyTorch layout [out_features, in_features]
    bias:    (10,)
    out_dtype: optional (e.g. jnp.bfloat16) — f32 accumulate + f32 bias add,
               cast only at the store.
    """
    B = x.shape[0]
    out_dtype = x.dtype if out_dtype is None else out_dtype
    budget = _chip_budget()

    x_itemsize = jnp.dtype(x.dtype).itemsize
    o_itemsize = jnp.dtype(out_dtype).itemsize

    # Lane padding: the 10-wide feature dim occupies a full 128-lane row, so
    # each block row costs 128*itemsize bytes per buffered copy in VMEM.
    nbuf = max(2, buffers)
    per_row = nbuf * 128 * (x_itemsize + o_itemsize)
    tb_vmem = max(8, ((budget["vmem_cap"] - (4 << 20)) // per_row) // 8 * 8)
    cap = max(8, (min(batch_tile, budget["tb_cap"], tb_vmem) // 8) * 8)

    if B <= cap:
        if budget["two_cores"] and B >= 16:
            # Guarantee >= 2 grid steps so both v7x TensorCores get work.
            tb = max(8, ((pl.cdiv(B, 2) + 7) // 8) * 8)
        else:
            tb = B  # block == full dim satisfies the (8,128) rule
    else:
        tb = cap
    grid = pl.cdiv(B, tb)

    vmem_limit = int(min(budget["vmem_cap"],
                         max(32 << 20, per_row * tb + (4 << 20))))

    # One-time transpose in the wrapper -> (IN, OUT); tiny (400 B) weight/bias
    # casts are negligible and keep the MXU inputs dtype-matched.
    w_t = weight.T.astype(x.dtype)
    bias2d = bias.reshape(1, OUT_FEATURES).astype(jnp.float32)

    return pl.pallas_call(
        linear_kernel,
        out_shape=jax.ShapeDtypeStruct((B, OUT_FEATURES), out_dtype),
        grid_spec=pltpu.PrefetchScalarGridSpec(
            num_scalar_prefetch=0,
            grid=(grid,),
            in_specs=[
                # x: tiled along batch (pipelined).
                _maybe_buffered_spec((tb, IN_FEATURES), lambda i: (i, 0), buffers),
                # weight / bias: constant index_map -> DMA'd once, VMEM-resident.
                pl.BlockSpec((IN_FEATURES, OUT_FEATURES), lambda i: (0, 0)),
                pl.BlockSpec((1, OUT_FEATURES), lambda i: (0, 0)),
            ],
            out_specs=_maybe_buffered_spec((tb, OUT_FEATURES), lambda i: (i, 0),
                                           buffers),
        ),
        compiler_params=pltpu.CompilerParams(
            dimension_semantics=("parallel",),
            vmem_limit_bytes=vmem_limit,
        ),
    )(x, w_t, bias2d)


# ---------------------------------------------------------------------------
# Feature-major forward: o^T = W @ x^T + b   (x_t is (10, B))
# Use when the caller can supply / fuse a feature-major activation layout.
# ---------------------------------------------------------------------------
def dummy_network_forward_feature_major(x_t, weight, bias, *, out_dtype=None,
                                        batch_tile=None, buffers=2):
    IN, B = x_t.shape
    assert IN == IN_FEATURES
    out_dtype = x_t.dtype if out_dtype is None else out_dtype
    budget = _chip_budget()

    x_itemsize = jnp.dtype(x_t.dtype).itemsize
    o_itemsize = jnp.dtype(out_dtype).itemsize

    # Sublane padding only: 10 rows pad to 16 sublanes (1.6x waste vs 12.8x in
    # the batch-major layout); the batch sits on lanes -> lane-dense stores.
    nbuf = max(2, buffers)
    per_col = nbuf * 16 * (x_itemsize + o_itemsize)
    tb_vmem = max(128, ((budget["vmem_cap"] - (4 << 20)) // per_col) // 128 * 128)
    cap = tb_vmem
    if batch_tile is not None:
        cap = min(cap, max(128, (batch_tile // 128) * 128))

    if B <= cap:
        if budget["two_cores"] and B >= 256:
            tb = max(128, ((pl.cdiv(B, 2) + 127) // 128) * 128)
        else:
            tb = B  # full dim satisfies the (8,128) rule even when B < 128
    else:
        tb = cap  # multiple of 128 -> lane constraint holds; last tile masked
    grid = pl.cdiv(B, tb)

    vmem_limit = int(min(budget["vmem_cap"],
                         max(32 << 20, per_col * tb + (4 << 20))))

    w = weight.astype(x_t.dtype)
    bias2d = bias.reshape(OUT_FEATURES, 1).astype(jnp.float32)

    return pl.pallas_call(
        linear_fm_kernel,
        out_shape=jax.ShapeDtypeStruct((OUT_FEATURES, B), out_dtype),
        grid_spec=pltpu.PrefetchScalarGridSpec(
            num_scalar_prefetch=0,
            grid=(grid,),
            in_specs=[
                _maybe_buffered_spec((IN_FEATURES, tb), lambda i: (0, i), buffers),
                pl.BlockSpec((OUT_FEATURES, IN_FEATURES), lambda i: (0, 0)),
                pl.BlockSpec((OUT_FEATURES, 1), lambda i: (0, 0)),
            ],
            out_specs=_maybe_buffered_spec((OUT_FEATURES, tb), lambda i: (0, i),
                                           buffers),
        ),
        compiler_params=pltpu.CompilerParams(
            dimension_semantics=("parallel",),
            vmem_limit_bytes=vmem_limit,
        ),
    )(x_t, w, bias2d)


# ---------------------------------------------------------------------------
# Params (mirrors nn.Linear default init)
# ---------------------------------------------------------------------------
def init_params(key):
    kw, kb = jax.random.split(key)
    bound = 1.0 / jnp.sqrt(jnp.float32(IN_FEATURES))
    weight = jax.random.uniform(
        kw, (OUT_FEATURES, IN_FEATURES), jnp.float32, minval=-bound, maxval=bound
    )
    bias = jax.random.uniform(
        kb, (OUT_FEATURES,), jnp.float32, minval=-bound, maxval=bound
    )
    return weight, bias


if __name__ == "__main__":
    key = jax.random.PRNGKey(0)
    kx, kp, kx2 = jax.random.split(key, 3)

    # --- small batch, f32, batch-major: exact nn.Linear semantics -----------
    batch = 2
    x = jax.random.normal(kx, (batch, IN_FEATURES), jnp.float32)
    weight, bias = init_params(kp)
    ref = x @ weight.T + bias

    out = jax.block_until_ready(dummy_network_forward(x, weight, bias))
    assert out.shape == (batch, OUT_FEATURES)
    assert jnp.allclose(out, ref, atol=1e-5, rtol=1e-5)

    # --- partial last tile (B not divisible by tb) ---------------------------
    b2 = 20
    x2 = jax.random.normal(kx2, (b2, IN_FEATURES), jnp.float32)
    ref2 = x2 @ weight.T + bias
    out2 = jax.block_until_ready(
        dummy_network_forward(x2, weight, bias, batch_tile=8)  # tb=8, grid=3
    )
    assert out2.shape == (b2, OUT_FEATURES)
    assert jnp.allclose(out2, ref2, atol=1e-5, rtol=1e-5)

    # --- bf16 output (f32 accumulate + f32 bias, cast only at the store) -----
    out_bf16 = jax.block_until_ready(
        dummy_network_forward(x, weight, bias, out_dtype=jnp.bfloat16)
    )
    assert out_bf16.dtype == jnp.bfloat16
    assert jnp.allclose(out_bf16.astype(jnp.float32), ref, atol=2e-2, rtol=2e-2)

    # --- feature-major (lane-dense) path --------------------------------------
    out_fm = jax.block_until_ready(
        dummy_network_forward_feature_major(x.T, weight, bias)
    )
    assert out_fm.shape == (OUT_FEATURES, batch)
    assert jnp.allclose(out_fm.T, ref, atol=1e-5, rtol=1e-5)

    print("KERNEL_OK")
</pallas_src>

<mosaic_0001>
module attributes {stable_mosaic.version = 11 : i64} {
  func.func @linear_kernel(%arg0: i32, %arg1: memref<2x10xf32, #tpu.memory_space<vmem>>, %arg2: memref<10x10xf32, #tpu.memory_space<vmem>>, %arg3: memref<1x10xf32, #tpu.memory_space<vmem>>, %arg4: memref<2x10xf32, #tpu.memory_space<vmem>>) attributes {dimension_semantics = [#tpu.dimension_semantics<parallel>], iteration_bounds = array<i64: 1>, scalar_prefetch = 0 : i64, scratch_operands = 0 : i64, tpu.core_type = #tpu.core_type<tc>, window_params = [{transform_indices = @transform_0, window_bounds = array<i64: 2, 10>}, {pipeline_mode = #tpu.pipeline_mode<synchronous>, transform_indices = @transform_1, window_bounds = array<i64: 10, 10>}, {pipeline_mode = #tpu.pipeline_mode<synchronous>, transform_indices = @transform_2, window_bounds = array<i64: 1, 10>}, {transform_indices = @transform_3, window_bounds = array<i64: 2, 10>}]} {
    %c0 = arith.constant 0 : index
    %c0_0 = arith.constant 0 : index
    %0 = vector.load %arg1[%c0, %c0_0] : memref<2x10xf32, #tpu.memory_space<vmem>>, vector<2x10xf32>
    %c0_1 = arith.constant 0 : index
    %c0_2 = arith.constant 0 : index
    %1 = vector.load %arg2[%c0_1, %c0_2] : memref<10x10xf32, #tpu.memory_space<vmem>>, vector<10x10xf32>
    %cst = arith.constant dense<0.000000e+00> : vector<2x10xf32>
    %2 = tpu.matmul %0, %1, %cst {dimension_numbers = #tpu.dot_dimension_numbers<[1], [0], [0], [1], [0, 0, 1, 1], [], []>} : vector<2x10xf32>, vector<10x10xf32>, vector<2x10xf32> -> vector<2x10xf32>
    %c0_3 = arith.constant 0 : index
    %c0_4 = arith.constant 0 : index
    %3 = vector.load %arg3[%c0_3, %c0_4] : memref<1x10xf32, #tpu.memory_space<vmem>>, vector<1x10xf32>
    %4 = vector.broadcast %3 : vector<1x10xf32> to vector<2x10xf32>
    %5 = arith.addf %2, %4 : vector<2x10xf32>
    %c0_5 = arith.constant 0 : index
    %c0_6 = arith.constant 0 : index
    %6 = vector.load %arg4[%c0_5, %c0_6] : memref<2x10xf32, #tpu.memory_space<vmem>>, vector<2x10xf32>
    tpu.vector_store %arg4[%c0_5, %c0_6], %5 {strides = array<i32>} : memref<2x10xf32, #tpu.memory_space<vmem>>, vector<2x10xf32>,
    return
  }
  func.func @transform_0(%arg0: i32) -> (i32, i32) {
    %c0_i32 = arith.constant 0 : i32
    %c0_i32_0 = arith.constant 0 : i32
    return %arg0, %c0_i32 : i32, i32
  }
  func.func @transform_1(%arg0: i32) -> (i32, i32) {
    %c0_i32 = arith.constant 0 : i32
    %c0_i32_0 = arith.constant 0 : i32
    %c0_i32_1 = arith.constant 0 : i32
    return %c0_i32, %c0_i32_0 : i32, i32
  }
  func.func @transform_2(%arg0: i32) -> (i32, i32) {
    %c0_i32 = arith.constant 0 : i32
    %c0_i32_0 = arith.constant 0 : i32
    %c0_i32_1 = arith.constant 0 : i32
    return %c0_i32, %c0_i32_0 : i32, i32
  }
  func.func @transform_3(%arg0: i32) -> (i32, i32) {
    %c0_i32 = arith.constant 0 : i32
    %c0_i32_0 = arith.constant 0 : i32
    return %arg0, %c0_i32 : i32, i32
  }
}

</mosaic_0001>

<llo_original>
// kernel: tpu_custom_call.1
$region0: #{tpu_custom_call.1}
  #allocation0 [shape = 'u32[]', space=smem, size = 0x4, offset = 0x4, fixed_abs, tag = 'smem constant byte address 0x4 - core index']
  #allocation1 [shape = 'u32[144,128]{1,0:T(1,128)}', space=vmem, size = 0x12000, scoped, tag = 'internal scratch']
  %s0 = inlined_call_operand.hbm [shape: f32[2,10], index: 0, kind: input, shape index: {}]
  %s1 = inlined_call_operand.hbm [shape: f32[10,10], index: 1, kind: input, shape index: {}]
  %s2 = inlined_call_operand.vmem [shape: f32[1,10], index: 2, kind: input, shape index: {}]
  %s3 = inlined_call_operand.hbm [shape: f32[2,10], index: 3, kind: output, shape index: {}]
  %s4 = sld [smem:[#allocation0]]
  $region30: #{tpu_custom_call.1} parent=0
    _
  %s6 = ssub.s32 1, %s4
  %s7 = scalar_select 0, %s6, %s4
  $region1: #{tpu_custom_call.1} parent=0
    #allocation2 [shape = 'u8[1024]{0}', space=vmem, size = 0x400, scoped, tag = 'input window, operand 0, single buffered']
    #allocation3 [shape = 's32[1]{0}', space=sflag, size = 0x4, scoped, tag = 'scoped memory for tpu_custom_call.1']
    #allocation4 [shape = 's32[1]{0}', space=sflag, size = 0x4, scoped, tag = 'scoped memory for tpu_custom_call.1']
    #allocation5 [shape = 'u8[8192]{0}', space=vmem, size = 0x2000, scoped, tag = 'input window, operand 1, single buffered']
    #allocation6 [shape = 's32[1]{0}', space=sflag, size = 0x4, scoped, tag = 'scoped memory for tpu_custom_call.1']
    #allocation7 [shape = 'u8[1024]{0}', space=vmem, size = 0x400, scoped, tag = 'output window, operand 0, single buffered']
    %8 = vsyncpa [#allocation3], 0
    %9 = vsyncpa [#allocation6], 0
    %10 = vsyncpa [#allocation4], 0
    // Predicated region
    $region2: #{tpu_custom_call.1} parent=1 // pred_check
      _
    $region3: #{tpu_custom_call.1} parent=1 // pred_check_branch
      %12 = sbr.rel (0) target = $region5
    $region4: #{tpu_custom_call.1} parent=1 // pred_region
      %s14 = ssub.s32 32, 32
      %15 = vsyncadd [#allocation3], %s14
      %s17 = sshll.u32 [#allocation2], 4
      %s18 = int_to_ptr.vmem [resolvable:$true] %s17
      %20 = dma.hbm_to_vmem [thread:$0]  %s0, 32, %s18, [#allocation3]
    $region5: #{tpu_custom_call.1} parent=1 // pred_fallthru
      _
    // Predicated region
    $region6: #{tpu_custom_call.1} parent=1 // pred_check
      _
    $region7: #{tpu_custom_call.1} parent=1 // pred_check_branch
      %22 = sbr.rel (0) target = $region9
    $region8: #{tpu_custom_call.1} parent=1 // pred_region
      %s24 = ssub.s32 256, 256
      %25 = vsyncadd [#allocation6], %s24
      %s26 = sshll.u32 [#allocation5], 4
      %s27 = int_to_ptr.vmem [resolvable:$true] %s26
      %32 = dma.hbm_to_vmem [thread:$0]  %s1, 256, %s27, [#allocation6], 128, 128, 8
    $region9: #{tpu_custom_call.1} parent=1 // pred_fallthru
      _
    // Predicated region
    $region10: #{tpu_custom_call.1} parent=1 // pred_check
      _
    $region11: #{tpu_custom_call.1} parent=1 // pred_check_branch
      %34 = sbr.rel (0) target = $region13
    $region12: #{tpu_custom_call.1} parent=1 // pred_region
      _
    $region13: #{tpu_custom_call.1} parent=1 // pred_fallthru
      _
    // Predicated region
    $region14: #{tpu_custom_call.1} parent=1 // pred_check
      _
    $region15: #{tpu_custom_call.1} parent=1 // pred_check_branch
      %36 = sbr.rel (0) target = $region17
    $region16: #{tpu_custom_call.1} parent=1 // pred_region
      %37 = dma.done [#allocation3], 32
    $region17: #{tpu_custom_call.1} parent=1 // pred_fallthru
      _
    // Predicated region
    $region18: #{tpu_custom_call.1} parent=1 // pred_check
      _
    $region19: #{tpu_custom_call.1} parent=1 // pred_check_branch
      %39 = sbr.rel (0) target = $region21
    $region20: #{tpu_custom_call.1} parent=1 // pred_region
      %40 = dma.done [#allocation6], 256
    $region21: #{tpu_custom_call.1} parent=1 // pred_fallthru
      _
    %v41 = vld [vmem:[#allocation2] sm:$0x3]
    %v42 = vld [vmem:[#allocation5] sm:$0xff]
    %v43 = vld [vmem:[#allocation5 + $0x8] sm:$0x3]
    %v44 = vld [vmem:[%s2] sm:$0x1]
    %v46 = vlaneseq
    %v47 = vshrl.u32 %v46, 7
    %v48 = vsub.s32 0, %v47
    %v49 = vrot.slane %v44, %v48
    %vm51 = vcmask 80896
    %v53 = vsel %vm51, %v41, 0
    %vm55 = vcmask 1041408
    %v57 = vsel %vm55, %v43, 0
    %59 = vmatprep.subr.mxu0 0.0
    %60 = vmatpush1.msra.mxu0 %v42
    %61 = vmatprep.subr.mxu0 0.0
    %62 = vmatpush1.msra.mxu0 %v57
    %63 = vmatprep.subr.mxu0 0.0
    %64 = vmatpush1.msra.mxu0 0.0
    %65 = vmatprep.subr.mxu0 0.0
    %66 = vmatpush1.msra.mxu0 0.0
    %67 = vmatprep.subr.mxu0 0.0
    %68 = vmatpush1.msra.mxu0 0.0
    %69 = vmatprep.subr.mxu0 0.0
    %70 = vmatpush1.msra.mxu0 0.0
    %71 = vmatprep.subr.mxu0 0.0
    %72 = vmatpush1.msra.mxu0 0.0
    %73 = vmatprep.subr.mxu0 0.0
    %74 = vmatpush1.msra.mxu0 0.0
    %75 = vmatprep.subr.mxu0 0.0
    %76 = vmatpush1.msra.mxu0 0.0
    %77 = vmatprep.subr.mxu0 0.0
    %78 = vmatpush1.msra.mxu0 0.0
    %79 = vmatprep.subr.mxu0 0.0
    %80 = vmatpush1.msra.mxu0 0.0
    %81 = vmatprep.subr.mxu0 0.0
    %82 = vmatpush1.msra.mxu0 0.0
    %83 = vmatprep.subr.mxu0 0.0
    %84 = vmatpush1.msra.mxu0 0.0
    %85 = vmatprep.subr.mxu0 0.0
    %86 = vmatpush1.msra.mxu0 0.0
    %87 = vmatprep.subr.mxu0 0.0
    %88 = vmatpush1.msra.mxu0 0.0
    %89 = vmatprep.subr.mxu0 0.0
    %90 = vmatpush1.msra.mxu0 0.0
    %91 = vmatprep.subr.mxu0 0.0
    %92 = vmatpush1.msra.mxu0 0.0
    %93 = vmatprep.subr.mxu0 0.0
    %94 = vmatpush1.msra.mxu0 0.0
    %95 = vmatprep.subr.mxu0 0.0
    %96 = vmatpush1.msra.mxu0 0.0
    %97 = vmatprep.subr.mxu0 0.0
    %98 = vmatpush1.msra.mxu0 0.0
    %99 = vmatprep.subr.mxu0 0.0
    %100 = vmatpush1.msra.mxu0 0.0
    %101 = vmatprep.subr.mxu0 0.0
    %102 = vmatpush1.msra.mxu0 0.0
    %103 = vmatprep.subr.mxu0 0.0
    %104 = vmatpush1.msra.mxu0 0.0
    %105 = vmatprep.subr.mxu0 0.0
    %106 = vmatpush1.msra.mxu0 0.0
    %107 = vmatprep.subr.mxu0 0.0
    %108 = vmatpush1.msra.mxu0 0.0
    %109 = vmatprep.subr.mxu0 0.0
    %110 = vmatpush1.msra.mxu0 0.0
    %111 = vmatprep.subr.mxu0 0.0
    %112 = vmatpush1.msra.mxu0 0.0
    %113 = vmatprep.subr.mxu0 0.0
    %114 = vmatpush1.msra.mxu0 0.0
    %115 = vmatprep.subr.mxu0 0.0
    %116 = vmatpush1.msra.mxu0 0.0
    %117 = vmatprep.subr.mxu0 0.0
    %118 = vmatpush1.msra.mxu0 0.0
    %119 = vmatprep.subr.mxu0 0.0
    %120 = vmatpush1.msra.mxu0 0.0
    %121 = vmatprep.subr.mxu0 0.0
    %122 = vmatpush1.msra.mxu0 0.0
    %123 = vmatprep.mubr.f32.mxu0 0.0
    %124 = vmatmul.mubr.f32.gmra.mrb[0].mxu0 %v53
    %v125 = vpop.f32.mrb[0].mxu0
    %v126 = vadd.f32 %v49, %v125
    %v127 = vpop.f32.mrb[0].mxu0
    %128 = vdwg.mxu0
    %vm129 = vcmask 74752
    %130 = vst.msk [vmem:[#allocation7] sm:$0x3] %vm129, %v126
    // Predicated region
    $region22: #{tpu_custom_call.1} parent=1 // pred_check
      _
    $region23: #{tpu_custom_call.1} parent=1 // pred_check_branch
      %132 = sbr.rel (0) target = $region25
    $region24: #{tpu_custom_call.1} parent=1 // pred_region
      %s134 = ssub.s32 32, 32
      %135 = vsyncadd [#allocation4], %s134
      %s137 = sshll.u32 [#allocation7], 4
      %s138 = int_to_ptr.vmem [resolvable:$true] %s137
      %140 = dma.vmem_to_hbm [thread:$0]  %s138, 32, %s3, [#allocation4]
    $region25: #{tpu_custom_call.1} parent=1 // pred_fallthru
      _
    // Predicated region
    $region26: #{tpu_custom_call.1} parent=1 // pred_check
      _
    $region27: #{tpu_custom_call.1} parent=1 // pred_check_branch
      %142 = sbr.rel (0) target = $region29
    $region28: #{tpu_custom_call.1} parent=1 // pred_region
      %143 = dma.done [#allocation4], 32
    $region29: #{tpu_custom_call.1} parent=1 // pred_fallthru
      _
    %144 = vsyncpa [#allocation3], 1
    %145 = vsyncpa [#allocation6], 1
    %146 = vsyncpa [#allocation4], 1

</llo_original>
